<compile_context>
chip_gen: v5e
topology: v5e:2x2
jax: 0.10.0
libtpu: 0.0.40
codegen_flags: <defaults>
</compile_context>

<pallas_src>
import functools

import jax
import jax.numpy as jnp
from jax.experimental import pallas as pl
from jax.experimental.pallas import tpu as pltpu

EPS = 1e-5
LANE = 128
SUBLANE = 8


def _round_up(x, m):
    return (x + m - 1) // m * m


def conv_bn_relu_kernel(w_ref, aT_ref, gb_ref, o_ref, *, m_valid):
    # w_ref:  (Cp, Kp)  flattened conv weight (PyTorch OI*KH*KW order), zero-padded
    # aT_ref: (Kp, Mp)  im2col patches, transposed, zero-padded
    # gb_ref: (Cp, 2)   [:, 0] = BN gamma, [:, 1] = BN beta (padded channels = 0)
    # o_ref:  (Cp, Mp)  relu(bn(conv(x))), lane-dense over M
    acc = jnp.dot(w_ref[...], aT_ref[...], preferred_element_type=jnp.float32)  # (Cp, Mp)

    # One-pass batch statistics over the (N, Ho, Wo) axis == lane axis.
    # Padded M columns of acc are exactly zero (A^T cols are zero, no bias), so summing
    # over the full padded tile and dividing by the valid count is exact.
    inv_m = jnp.float32(1.0 / m_valid)
    s = jnp.sum(acc, axis=1, keepdims=True)          # (Cp, 1)
    ss = jnp.sum(acc * acc, axis=1, keepdims=True)   # (Cp, 1)
    mean = s * inv_m
    var = ss * inv_m - mean * mean  # TODO(synk): two-pass/Welford when M gets tiled

    gamma = gb_ref[:, 0:1]
    beta = gb_ref[:, 1:2]
    scale = jax.lax.rsqrt(var + EPS) * gamma          # (Cp, 1), broadcast over lanes
    y = (acc - mean) * scale + beta
    o_ref[...] = jnp.maximum(y, 0.0).astype(o_ref.dtype)


def _im2col_T(x, kh, kw, stride, pad, k_pad, m_pad):
    """x: (N, Cin, H, W) -> A^T: (k_pad, m_pad) in x.dtype, via ONE fused gather.

    conv_general_dilated_patches emits channels in (Cin, KH, KW) order (== PyTorch
    OIHW flatten order); the "CNHW" out spec gives (K, N, Ho, Wo) directly, so no
    transpose is needed — just a reshape and a single zero-pad."""
    n, c, h, w = x.shape
    patches = jax.lax.conv_general_dilated_patches(
        x, filter_shape=(kh, kw), window_strides=(stride, stride),
        padding=[(pad, pad), (pad, pad)],
        dimension_numbers=("NCHW", "OIHW", "CNHW"))
    k = c * kh * kw
    ho = (h + 2 * pad - kh) // stride + 1
    wo = (w + 2 * pad - kw) // stride + 1
    aT = jnp.pad(patches.reshape(k, n * ho * wo),
                 ((0, k_pad - k), (0, m_pad - n * ho * wo)))
    return aT, ho, wo


def conv_bn_relu(x, conv_w, conv_b, bn_gamma, bn_beta, *, stride=2, pad=5,
                 matmul_dtype=jnp.float32, channel_major_output=False):
    """x: (N, Cin, H, W) NCHW.  Returns (N, Cout, Ho, Wo) NCHW by default, or
    (Cout, N, Ho, Wo) when channel_major_output=True (skips one HBM transpose).

    matmul_dtype=jnp.bfloat16 halves im2col + MXU operand bytes (recommended on
    v5e/v6e); accumulation and all BN/ReLU math stay f32."""
    del conv_b  # removed exactly by the training-mode BN mean subtraction
    n, _, h, w = x.shape
    cout, cin, kh, kw = conv_w.shape
    k = cin * kh * kw
    ho = (h + 2 * pad - kh) // stride + 1
    wo = (w + 2 * pad - kw) // stride + 1
    m = n * ho * wo

    k_pad = _round_up(k, LANE)        # 245 -> 256
    m_pad = _round_up(m, LANE)        # 200 -> 256 (lane axis of the output)
    c_pad = _round_up(cout, SUBLANE)  # 6   -> 8   (sublane axis of the output)

    # Cast BEFORE the gather/pad so the bf16 path moves half the bytes end-to-end.
    aT, ho, wo = _im2col_T(x.astype(matmul_dtype), kh, kw, stride, pad, k_pad, m_pad)
    w_mat = jnp.pad(conv_w.reshape(cout, k).astype(matmul_dtype),
                    ((0, c_pad - cout), (0, k_pad - k)))
    gb = jnp.pad(jnp.stack([bn_gamma, bn_beta], axis=1).astype(jnp.float32),
                 ((0, c_pad - cout), (0, 0)))  # (Cp, 2): gamma | beta packed

    vmem = pl.BlockSpec(memory_space=pltpu.MemorySpace.VMEM)
    cost = pl.CostEstimate(
        flops=2 * m_pad * k_pad * c_pad,
        transcendentals=0,
        bytes_accessed=(aT.size * aT.dtype.itemsize
                        + w_mat.size * w_mat.dtype.itemsize
                        + gb.size * 4 + c_pad * m_pad * 4),
    )

    out = pl.pallas_call(
        functools.partial(conv_bn_relu_kernel, m_valid=float(m)),
        out_shape=jax.ShapeDtypeStruct((c_pad, m_pad), jnp.float32),
        in_specs=[vmem, vmem, vmem],
        out_specs=vmem,
        cost_estimate=cost,
    )(w_mat, aT, gb)

    # TODO(synk): for much larger N/H/W, add an M grid (marked "parallel" so v7x's two
    # TensorCores split it), accumulate BN sum/sumsq in a (Cp, 2) VMEM scratch with a
    # pl.when finalize, size tiles against v7x's 64 MiB VMEM, and fuse the im2col
    # gather in-kernel (memory_space=pl.ANY per-tap DMA) instead of materializing A^T.
    cnhw = out[:cout, :m].reshape(cout, n, ho, wo)
    if channel_major_output:
        return cnhw
    return cnhw.transpose(1, 0, 2, 3)


def _reference(x, conv_w, conv_b, bn_gamma, bn_beta, *, stride=2, pad=5):
    """Plain-JAX reference (lax conv + training-mode BN + ReLU) mirroring the module."""
    y = jax.lax.conv_general_dilated(
        x.astype(jnp.float32), conv_w.astype(jnp.float32),
        window_strides=(stride, stride), padding=[(pad, pad), (pad, pad)],
        dimension_numbers=("NCHW", "OIHW", "NCHW"))
    y = y + conv_b.reshape(1, -1, 1, 1)
    mean = jnp.mean(y, axis=(0, 2, 3), keepdims=True)
    var = jnp.mean((y - mean) ** 2, axis=(0, 2, 3), keepdims=True)
    y = (y - mean) * jax.lax.rsqrt(var + EPS)
    y = y * bn_gamma.reshape(1, -1, 1, 1) + bn_beta.reshape(1, -1, 1, 1)
    return jnp.maximum(y, 0.0)


if __name__ == "__main__":
    key = jax.random.PRNGKey(0)
    k_x, k_w, k_b = jax.random.split(key, 3)

    # Small shapes consistent with the module: N=2, Cin=5, H=W=16.
    N, CIN, H, W = 2, 5, 16, 16
    COUT, KH, KW = 6, 7, 7

    x = jax.random.normal(k_x, (N, CIN, H, W), dtype=jnp.float32)

    # Deterministic parameter init (kaiming-uniform-like bound, fixed PRNG).
    fan_in = CIN * KH * KW
    bound = 1.0 / (fan_in ** 0.5)
    conv_w = jax.random.uniform(k_w, (COUT, CIN, KH, KW), jnp.float32, -bound, bound)
    conv_b = jax.random.uniform(k_b, (COUT,), jnp.float32, -bound, bound)
    bn_gamma = jnp.ones((COUT,), jnp.float32)   # nn.BatchNorm2d default weight
    bn_beta = jnp.zeros((COUT,), jnp.float32)   # nn.BatchNorm2d default bias

    ref = jax.block_until_ready(_reference(x, conv_w, conv_b, bn_gamma, bn_beta))

    # f32 operand path: matches the PyTorch module numerics to 1e-4.
    out = jax.block_until_ready(conv_bn_relu(x, conv_w, conv_b, bn_gamma, bn_beta))
    assert out.shape == (N, COUT, 10, 10), out.shape
    assert jnp.allclose(out, ref, rtol=1e-4, atol=1e-4), float(jnp.max(jnp.abs(out - ref)))

    # bf16 operand path (recommended default on v5e/v6e): f32 accumulate, half the
    # im2col/MXU bytes; verified with a looser tolerance. Also exercises the
    # channel-major output that skips the trailing NCHW transpose.
    out_bf16 = jax.block_until_ready(
        conv_bn_relu(x, conv_w, conv_b, bn_gamma, bn_beta,
                     matmul_dtype=jnp.bfloat16, channel_major_output=True))
    assert out_bf16.shape == (COUT, N, 10, 10), out_bf16.shape
    diff = jnp.abs(out_bf16.transpose(1, 0, 2, 3) - ref)
    assert jnp.allclose(out_bf16.transpose(1, 0, 2, 3), ref, rtol=5e-2, atol=5e-2), \
        float(jnp.max(diff))

    print("KERNEL_OK")
</pallas_src>

<mosaic_0001>
module attributes {stable_mosaic.version = 11 : i64} {
  func.func @conv_bn_relu_kernel(%arg0: memref<8x256xf32, #tpu.memory_space<vmem>>, %arg1: memref<256x256xf32, #tpu.memory_space<vmem>>, %arg2: memref<8x2xf32, #tpu.memory_space<vmem>>, %arg3: memref<8x256xf32, #tpu.memory_space<vmem>>) attributes {dimension_semantics = [], scalar_prefetch = 0 : i64, scratch_operands = 0 : i64, tpu.core_type = #tpu.core_type<tc>} {
    %c0 = arith.constant 0 : index
    %c0_0 = arith.constant 0 : index
    %0 = vector.load %arg0[%c0, %c0_0] : memref<8x256xf32, #tpu.memory_space<vmem>>, vector<8x256xf32>
    %c0_1 = arith.constant 0 : index
    %c0_2 = arith.constant 0 : index
    %1 = vector.load %arg1[%c0_1, %c0_2] : memref<256x256xf32, #tpu.memory_space<vmem>>, vector<256x256xf32>
    %cst = arith.constant dense<0.000000e+00> : vector<8x256xf32>
    %2 = tpu.matmul %0, %1, %cst {dimension_numbers = #tpu.dot_dimension_numbers<[1], [0], [0], [1], [0, 0, 1, 1], [], []>} : vector<8x256xf32>, vector<256x256xf32>, vector<8x256xf32> -> vector<8x256xf32>
    %cst_3 = arith.constant dense<0.000000e+00> : vector<8xf32>
    %3 = vector.multi_reduction <add>, %2, %cst_3 [1] : vector<8x256xf32> to vector<8xf32>
    %4 = vector.shape_cast %3 : vector<8xf32> to vector<8x1xf32>
    %5 = arith.mulf %2, %2 : vector<8x256xf32>
    %cst_4 = arith.constant dense<0.000000e+00> : vector<8xf32>
    %6 = vector.multi_reduction <add>, %5, %cst_4 [1] : vector<8x256xf32> to vector<8xf32>
    %7 = vector.shape_cast %6 : vector<8xf32> to vector<8x1xf32>
    %cst_5 = arith.constant 5.000000e-03 : f32
    %8 = vector.broadcast %cst_5 : f32 to vector<8x1xf32>
    %9 = arith.mulf %4, %8 : vector<8x1xf32>
    %cst_6 = arith.constant 5.000000e-03 : f32
    %10 = vector.broadcast %cst_6 : f32 to vector<8x1xf32>
    %11 = arith.mulf %7, %10 : vector<8x1xf32>
    %12 = arith.mulf %9, %9 : vector<8x1xf32>
    %13 = arith.subf %11, %12 : vector<8x1xf32>
    %c0_7 = arith.constant 0 : index
    %c0_8 = arith.constant 0 : index
    %14 = vector.load %arg2[%c0_7, %c0_8] : memref<8x2xf32, #tpu.memory_space<vmem>>, vector<8x1xf32>
    %c0_9 = arith.constant 0 : index
    %c1 = arith.constant 1 : index
    %15 = vector.load %arg2[%c0_9, %c1] : memref<8x2xf32, #tpu.memory_space<vmem>>, vector<8x1xf32>
    %cst_10 = arith.constant 9.99999974E-6 : f32
    %16 = vector.broadcast %cst_10 : f32 to vector<8x1xf32>
    %17 = arith.addf %13, %16 : vector<8x1xf32>
    %18 = math.rsqrt %17 : vector<8x1xf32>
    %19 = arith.mulf %18, %14 : vector<8x1xf32>
    %20 = vector.broadcast %9 : vector<8x1xf32> to vector<8x256xf32>
    %21 = arith.subf %2, %20 : vector<8x256xf32>
    %22 = vector.broadcast %19 : vector<8x1xf32> to vector<8x256xf32>
    %23 = arith.mulf %21, %22 : vector<8x256xf32>
    %24 = vector.broadcast %15 : vector<8x1xf32> to vector<8x256xf32>
    %25 = arith.addf %23, %24 : vector<8x256xf32>
    %cst_11 = arith.constant 0.000000e+00 : f32
    %26 = vector.broadcast %cst_11 : f32 to vector<8x256xf32>
    %27 = arith.maximumf %25, %26 : vector<8x256xf32>
    %c0_12 = arith.constant 0 : index
    %c0_13 = arith.constant 0 : index
    %28 = vector.load %arg3[%c0_12, %c0_13] : memref<8x256xf32, #tpu.memory_space<vmem>>, vector<8x256xf32>
    tpu.vector_store %arg3[%c0_12, %c0_13], %27 {strides = array<i32>} : memref<8x256xf32, #tpu.memory_space<vmem>>, vector<8x256xf32>,
    return
  }
}

</mosaic_0001>

<llo_original>
// kernel: tpu_custom_call.1
$region0: #{tpu_custom_call.1}
  #allocation0 [shape = 'u32[]', space=smem, size = 0x4, offset = 0x4, fixed_abs, tag = 'smem constant byte address 0x4 - core index']
  #allocation1 [shape = 'u32[72,128]{1,0:T(1,128)}', space=vmem, size = 0x9000, scoped, tag = 'internal scratch']
  %s0 = inlined_call_operand.hbm [shape: f32[8,256], index: 0, kind: input, shape index: {}]
  %s1 = inlined_call_operand.hbm [shape: f32[256,256], index: 1, kind: input, shape index: {}]
  %s2 = inlined_call_operand.vmem [shape: f32[8,2], index: 2, kind: input, shape index: {}]
  %s3 = inlined_call_operand.hbm [shape: f32[8,256], index: 3, kind: output, shape index: {}]
  %s4 = sld [smem:[#allocation0]]
  $region30: #{tpu_custom_call.1} parent=0
    _
  %s6 = ssub.s32 1, %s4
  %s7 = scalar_select 0, %s6, %s4
  $region1: #{tpu_custom_call.1} parent=0
    #allocation2 [shape = 'u8[8192]{0}', space=vmem, size = 0x2000, scoped, tag = 'input window, operand 0, single buffered']
    #allocation3 [shape = 's32[1]{0}', space=sflag, size = 0x4, scoped, tag = 'scoped memory for tpu_custom_call.1']
    #allocation4 [shape = 's32[1]{0}', space=sflag, size = 0x4, scoped, tag = 'scoped memory for tpu_custom_call.1']
    #allocation5 [shape = 'u8[262144]{0}', space=vmem, size = 0x40000, scoped, tag = 'input window, operand 1, single buffered']
    #allocation6 [shape = 's32[1]{0}', space=sflag, size = 0x4, scoped, tag = 'scoped memory for tpu_custom_call.1']
    #allocation7 [shape = 'u8[8192]{0}', space=vmem, size = 0x2000, scoped, tag = 'output window, operand 0, single buffered']
    %8 = vsyncpa [#allocation3], 0
    %9 = vsyncpa [#allocation6], 0
    %10 = vsyncpa [#allocation4], 0
    // Predicated region
    $region2: #{tpu_custom_call.1} parent=1 // pred_check
      _
    $region3: #{tpu_custom_call.1} parent=1 // pred_check_branch
      %12 = sbr.rel (0) target = $region5
    $region4: #{tpu_custom_call.1} parent=1 // pred_region
      %14 = vsyncadd [#allocation3], 0
      %s16 = sshll.u32 %s0, 4
      %s17 = int_to_ptr.hbm [resolvable:$true] %s16
      %s18 = sshll.u32 [#allocation2], 4
      %s19 = int_to_ptr.vmem [resolvable:$true] %s18
      %21 = dma.hbm_to_vmem [thread:$0]  %s17, 256, %s19, [#allocation3]
    $region5: #{tpu_custom_call.1} parent=1 // pred_fallthru
      _
    // Predicated region
    $region6: #{tpu_custom_call.1} parent=1 // pred_check
      _
    $region7: #{tpu_custom_call.1} parent=1 // pred_check_branch
      %23 = sbr.rel (0) target = $region9
    $region8: #{tpu_custom_call.1} parent=1 // pred_region
      %25 = vsyncadd [#allocation6], 0
      %s26 = sshll.u32 %s1, 4
      %s27 = int_to_ptr.hbm [resolvable:$true] %s26
      %s28 = sshll.u32 [#allocation5], 4
      %s29 = int_to_ptr.vmem [resolvable:$true] %s28
      %34 = dma.hbm_to_vmem [thread:$0]  %s27, 8192, %s29, [#allocation6], 256, 256, 16
    $region9: #{tpu_custom_call.1} parent=1 // pred_fallthru
      _
    // Predicated region
    $region10: #{tpu_custom_call.1} parent=1 // pred_check
      _
    $region11: #{tpu_custom_call.1} parent=1 // pred_check_branch
      %36 = sbr.rel (0) target = $region13
    $region12: #{tpu_custom_call.1} parent=1 // pred_region
      _
    $region13: #{tpu_custom_call.1} parent=1 // pred_fallthru
      _
    // Predicated region
    $region14: #{tpu_custom_call.1} parent=1 // pred_check
      _
    $region15: #{tpu_custom_call.1} parent=1 // pred_check_branch
      %38 = sbr.rel (0) target = $region17
    $region16: #{tpu_custom_call.1} parent=1 // pred_region
      %40 = dma.done [#allocation3], 256
    $region17: #{tpu_custom_call.1} parent=1 // pred_fallthru
      _
    // Predicated region
    $region18: #{tpu_custom_call.1} parent=1 // pred_check
      _
    $region19: #{tpu_custom_call.1} parent=1 // pred_check_branch
      %42 = sbr.rel (0) target = $region21
    $region20: #{tpu_custom_call.1} parent=1 // pred_region
      %44 = dma.done [#allocation6], 8192
    $region21: #{tpu_custom_call.1} parent=1 // pred_fallthru
      _
    %v45 = vld [vmem:[#allocation2] sm:$0xff]
    %v46 = vld [vmem:[#allocation2 + $0x8] sm:$0xff]
    %v47 = vld [vmem:[#allocation5] sm:$0xff]
    %v48 = vld [vmem:[#allocation5 + $0x8] sm:$0xff]
    %v49 = vld [vmem:[#allocation5 + $0x10] sm:$0xff]
    %v50 = vld [vmem:[#allocation5 + $0x18] sm:$0xff]
    %v51 = vld [vmem:[#allocation5 + $0x20] sm:$0xff]
    %v52 = vld [vmem:[#allocation5 + $0x28] sm:$0xff]
    %v53 = vld [vmem:[#allocation5 + $0x30] sm:$0xff]
    %v54 = vld [vmem:[#allocation5 + $0x38] sm:$0xff]
    %v55 = vld [vmem:[#allocation5 + $0x40] sm:$0xff]
    %v56 = vld [vmem:[#allocation5 + $0x48] sm:$0xff]
    %v57 = vld [vmem:[#allocation5 + $0x50] sm:$0xff]
    %v58 = vld [vmem:[#allocation5 + $0x58] sm:$0xff]
    %v59 = vld [vmem:[#allocation5 + $0x60] sm:$0xff]
    %v60 = vld [vmem:[#allocation5 + $0x68] sm:$0xff]
    %v61 = vld [vmem:[#allocation5 + $0x70] sm:$0xff]
    %v62 = vld [vmem:[#allocation5 + $0x78] sm:$0xff]
    %v63 = vld [vmem:[#allocation5 + $0x80] sm:$0xff]
    %v64 = vld [vmem:[#allocation5 + $0x88] sm:$0xff]
    %v65 = vld [vmem:[#allocation5 + $0x90] sm:$0xff]
    %v66 = vld [vmem:[#allocation5 + $0x98] sm:$0xff]
    %v67 = vld [vmem:[#allocation5 + $0xa0] sm:$0xff]
    %v68 = vld [vmem:[#allocation5 + $0xa8] sm:$0xff]
    %v69 = vld [vmem:[#allocation5 + $0xb0] sm:$0xff]
    %v70 = vld [vmem:[#allocation5 + $0xb8] sm:$0xff]
    %v71 = vld [vmem:[#allocation5 + $0xc0] sm:$0xff]
    %v72 = vld [vmem:[#allocation5 + $0xc8] sm:$0xff]
    %v73 = vld [vmem:[#allocation5 + $0xd0] sm:$0xff]
    %v74 = vld [vmem:[#allocation5 + $0xd8] sm:$0xff]
    %v75 = vld [vmem:[#allocation5 + $0xe0] sm:$0xff]
    %v76 = vld [vmem:[#allocation5 + $0xe8] sm:$0xff]
    %v77 = vld [vmem:[#allocation5 + $0xf0] sm:$0xff]
    %v78 = vld [vmem:[#allocation5 + $0xf8] sm:$0xff]
    %v79 = vld [vmem:[#allocation5 + $0x100] sm:$0xff]
    %v80 = vld [vmem:[#allocation5 + $0x108] sm:$0xff]
    %v81 = vld [vmem:[#allocation5 + $0x110] sm:$0xff]
    %v82 = vld [vmem:[#allocation5 + $0x118] sm:$0xff]
    %v83 = vld [vmem:[#allocation5 + $0x120] sm:$0xff]
    %v84 = vld [vmem:[#allocation5 + $0x128] sm:$0xff]
    %v85 = vld [vmem:[#allocation5 + $0x130] sm:$0xff]
    %v86 = vld [vmem:[#allocation5 + $0x138] sm:$0xff]
    %v87 = vld [vmem:[#allocation5 + $0x140] sm:$0xff]
    %v88 = vld [vmem:[#allocation5 + $0x148] sm:$0xff]
    %v89 = vld [vmem:[#allocation5 + $0x150] sm:$0xff]
    %v90 = vld [vmem:[#allocation5 + $0x158] sm:$0xff]
    %v91 = vld [vmem:[#allocation5 + $0x160] sm:$0xff]
    %v92 = vld [vmem:[#allocation5 + $0x168] sm:$0xff]
    %v93 = vld [vmem:[#allocation5 + $0x170] sm:$0xff]
    %v94 = vld [vmem:[#allocation5 + $0x178] sm:$0xff]
    %v95 = vld [vmem:[#allocation5 + $0x180] sm:$0xff]
    %v96 = vld [vmem:[#allocation5 + $0x188] sm:$0xff]
    %v97 = vld [vmem:[#allocation5 + $0x190] sm:$0xff]
    %v98 = vld [vmem:[#allocation5 + $0x198] sm:$0xff]
    %v99 = vld [vmem:[#allocation5 + $0x1a0] sm:$0xff]
    %v100 = vld [vmem:[#allocation5 + $0x1a8] sm:$0xff]
    %v101 = vld [vmem:[#allocation5 + $0x1b0] sm:$0xff]
    %v102 = vld [vmem:[#allocation5 + $0x1b8] sm:$0xff]
    %v103 = vld [vmem:[#allocation5 + $0x1c0] sm:$0xff]
    %v104 = vld [vmem:[#allocation5 + $0x1c8] sm:$0xff]
    %v105 = vld [vmem:[#allocation5 + $0x1d0] sm:$0xff]
    %v106 = vld [vmem:[#allocation5 + $0x1d8] sm:$0xff]
    %v107 = vld [vmem:[#allocation5 + $0x1e0] sm:$0xff]
    %v108 = vld [vmem:[#allocation5 + $0x1e8] sm:$0xff]
    %v109 = vld [vmem:[#allocation5 + $0x1f0] sm:$0xff]
    %v110 = vld [vmem:[#allocation5 + $0x1f8] sm:$0xff]
    %111 = vmatpush.msra.mxu0 %v77
    %112 = vmatpush.msra.mxu0 %v75
    %113 = vmatpush.msra.mxu0 %v73
    %114 = vmatpush.msra.mxu0 %v71
    %115 = vmatpush.msra.mxu0 %v69
    %116 = vmatpush.msra.mxu0 %v67
    %117 = vmatpush.msra.mxu0 %v65
    %118 = vmatpush.msra.mxu0 %v63
    %119 = vmatpush.msra.mxu0 %v61
    %120 = vmatpush.msra.mxu0 %v59
    %121 = vmatpush.msra.mxu0 %v57
    %122 = vmatpush.msra.mxu0 %v55
    %123 = vmatpush.msra.mxu0 %v53
    %124 = vmatpush.msra.mxu0 %v51
    %125 = vmatpush.msra.mxu0 %v49
    %126 = vmatpush.msra.mxu0 %v47
    %127 = vmatmul.f32.gmra.mxu0 %v45
    %v128 = vpop.f32.mrf.mxu0
    %v129 = vadd.f32 0.0, %v128
    %130 = vdwg.mxu0
    %131 = vmatpush.msra.mxu0 %v109
    %132 = vmatpush.msra.mxu0 %v107
    %133 = vmatpush.msra.mxu0 %v105
    %134 = vmatpush.msra.mxu0 %v103
    %135 = vmatpush.msra.mxu0 %v101
    %136 = vmatpush.msra.mxu0 %v99
    %137 = vmatpush.msra.mxu0 %v97
    %138 = vmatpush.msra.mxu0 %v95
    %139 = vmatpush.msra.mxu0 %v93
    %140 = vmatpush.msra.mxu0 %v91
    %141 = vmatpush.msra.mxu0 %v89
    %142 = vmatpush.msra.mxu0 %v87
    %143 = vmatpush.msra.mxu0 %v85
    %144 = vmatpush.msra.mxu0 %v83
    %145 = vmatpush.msra.mxu0 %v81
    %146 = vmatpush.msra.mxu0 %v79
    %147 = vmatmul.f32.gmra.mxu0 %v46
    %v148 = vpop.f32.mrf.mxu0
    %v149 = vadd.f32 %v129, %v148
    %150 = vdwg.mxu0
    %151 = vmatpush.msra.mxu0 %v78
    %152 = vmatpush.msra.mxu0 %v76
    %153 = vmatpush.msra.mxu0 %v74
    %154 = vmatpush.msra.mxu0 %v72
    %155 = vmatpush.msra.mxu0 %v70
    %156 = vmatpush.msra.mxu0 %v68
    %157 = vmatpush.msra.mxu0 %v66
    %158 = vmatpush.msra.mxu0 %v64
    %159 = vmatpush.msra.mxu0 %v62
    %160 = vmatpush.msra.mxu0 %v60
    %161 = vmatpush.msra.mxu0 %v58
    %162 = vmatpush.msra.mxu0 %v56
    %163 = vmatpush.msra.mxu0 %v54
    %164 = vmatpush.msra.mxu0 %v52
    %165 = vmatpush.msra.mxu0 %v50
    %166 = vmatpush.msra.mxu0 %v48
    %167 = vmatmul.f32.gmra.mxu0 %v45
    %v168 = vpop.f32.mrf.mxu0
    %v169 = vadd.f32 0.0, %v168
    %170 = vdwg.mxu0
    %171 = vmatpush.msra.mxu0 %v110
    %172 = vmatpush.msra.mxu0 %v108
    %173 = vmatpush.msra.mxu0 %v106
    %174 = vmatpush.msra.mxu0 %v104
    %175 = vmatpush.msra.mxu0 %v102
    %176 = vmatpush.msra.mxu0 %v100
    %177 = vmatpush.msra.mxu0 %v98
    %178 = vmatpush.msra.mxu0 %v96
    %179 = vmatpush.msra.mxu0 %v94
    %180 = vmatpush.msra.mxu0 %v92
    %181 = vmatpush.msra.mxu0 %v90
    %182 = vmatpush.msra.mxu0 %v88
    %183 = vmatpush.msra.mxu0 %v86
    %184 = vmatpush.msra.mxu0 %v84
    %185 = vmatpush.msra.mxu0 %v82
    %186 = vmatpush.msra.mxu0 %v80
    %187 = vmatmul.f32.gmra.mxu0 %v46
    %v188 = vpop.f32.mrf.mxu0
    %v189 = vadd.f32 %v169, %v188
    %190 = vdwg.mxu0
    %v191 = vadd.f32 %v149, %v189
    %192 = vadd.xlane.f32.xlu0 %v191
    %v193 = vpop.xlane.xlu0 %192
    %v194 = vmul.f32 %v149, %v149
    %v195 = vmul.f32 %v189, %v189
    %v196 = vadd.f32 %v194, %v195
    %197 = vadd.xlane.f32.xlu0 %v196
    %v198 = vpop.xlane.xlu0 %197
    %v199 = vmul.f32 %v193, 0.005
    %v200 = vmul.f32 %v198, 0.005
    %v201 = vmul.f32 %v199, %v199
    %v202 = vsub.f32 %v200, %v201
    %v203 = vld [vmem:[%s2] sm:$0xff]
    %v204 = vadd.f32 %v202, 1e-05
    %v205 = vrsqrt.pop %v204
    %v206 = vmul.f32 %v205, %v204
    %v207 = vmul.f32 %v206, %v205
    %v208 = vmul.f32 0.5, %v207
    %v209 = vsub.f32 1.5, %v208
    %v210 = vmul.f32 %v205, %v209
    %vm211 = vweird.f32 %v204
    %vm212 = vweird.f32 %v205
    %vm213 = vmor %vm211, %vm212
    %v214 = vsel %vm213, %v205, %v210
    %v215 = vmul.f32 %v214, %v203
    %v216 = vsub.f32 %v149, %v199
    %v217 = vsub.f32 %v189, %v199
    %219 = vset.pattern.permute.xlu0 0
    %220 = vperm.xlu0 %219, %v215
    %v221 = vpop.permute.xlu0 %220
    %v223 = vmul.f32 %v216, %v221
    %v224 = vmul.f32 %v217, %v221
    %226 = vset.pattern.permute.xlu0 1
    %227 = vperm.xlu0 %226, %v203
    %v228 = vpop.permute.xlu0 %227
    %v230 = vadd.f32 %v223, %v228
    %v231 = vadd.f32 %v224, %v228
    %v232 = vmax.f32 %v230, 0.0
    %v233 = vmax.f32 %v231, 0.0
    %234 = vst [vmem:[#allocation7] sm:$0xff] %v232
    %235 = vst [vmem:[#allocation7 + $0x8] sm:$0xff] %v233
    // Predicated region
    $region22: #{tpu_custom_call.1} parent=1 // pred_check
      _
    $region23: #{tpu_custom_call.1} parent=1 // pred_check_branch
      %237 = sbr.rel (0) target = $region25
    $region24: #{tpu_custom_call.1} parent=1 // pred_region
      %239 = vsyncadd [#allocation4], 0
      %s241 = sshll.u32 [#allocation7], 4
      %s242 = int_to_ptr.vmem [resolvable:$true] %s241
      %s243 = sshll.u32 %s3, 4
      %s244 = int_to_ptr.hbm [resolvable:$true] %s243
      %246 = dma.vmem_to_hbm [thread:$0]  %s242, 256, %s244, [#allocation4]
    $region25: #{tpu_custom_call.1} parent=1 // pred_fallthru
      _
    // Predicated region
    $region26: #{tpu_custom_call.1} parent=1 // pred_check
      _
    $region27: #{tpu_custom_call.1} parent=1 // pred_check_branch
      %248 = sbr.rel (0) target = $region29
    $region28: #{tpu_custom_call.1} parent=1 // pred_region
      %250 = dma.done [#allocation4], 256
    $region29: #{tpu_custom_call.1} parent=1 // pred_fallthru
      _
    %251 = vsyncpa [#allocation3], 1
    %252 = vsyncpa [#allocation6], 1
    %253 = vsyncpa [#allocation4], 1

</llo_original>
